<compile_context>
chip_gen: v6e
topology: v6e:2x2x1
jax: 0.10.0
libtpu: 0.0.40
codegen_flags: <defaults>
</compile_context>

<pallas_src>
import functools

import jax
import jax.numpy as jnp
from jax.experimental import pallas as pl
from jax.experimental.pallas import tpu as pltpu


# ----------------------------------------------------------------------------
# host-side constants (computed once per call, passed as constant-index inputs)
# ----------------------------------------------------------------------------
def _head_mask(d_model, head_dim, dtype=jnp.float32):
    """(D, D) block-diagonal indicator M[(h,d),(h',m)] = (h == h')."""
    row_h = jax.lax.broadcasted_iota(jnp.int32, (d_model, d_model), 0) // head_dim
    col_h = jax.lax.broadcasted_iota(jnp.int32, (d_model, d_model), 1) // head_dim
    return (row_h == col_h).astype(dtype)


def _head_select(d_model, n_head, dtype=jnp.float32):
    """(D, H) indicator Hsel[(h,d), h'] = (h == h') for per-head reductions."""
    head_dim = d_model // n_head
    row_h = jax.lax.broadcasted_iota(jnp.int32, (d_model, n_head), 0) // head_dim
    col_h = jax.lax.broadcasted_iota(jnp.int32, (d_model, n_head), 1)
    return (row_h == col_h).astype(dtype)


def _choose_block(total, preferred):
    """Sequence tile: full seq when small, else an MXU-friendly 256/128/8
    multiple; ragged tails are masked in-kernel rather than shrinking tiles."""
    if total <= preferred:
        return int(total)
    for q in (256, 128, 8):
        if preferred >= q:
            return (preferred // q) * q
    return int(total)


def prepare_params(raw, compute_dtype=jnp.bfloat16):
    """Pre-transpose (out,in)->(in,out) and pre-cast weights ONCE, outside forward."""
    cdt = jnp.dtype(compute_dtype)

    def w(name):
        return jnp.asarray(raw[name]).T.astype(cdt)          # (D_in, D_out)

    def b(name):
        return jnp.asarray(raw[name]).reshape(1, -1).astype(jnp.float32)

    return {
        "wq_t": w("wq"), "bq": b("bq"),
        "wk_t": w("wk"), "bk": b("bk"),
        "wv_t": w("wv"), "bv": b("bv"),
        "wo_t": w("wo"), "bo": b("bo"),
    }


# ----------------------------------------------------------------------------
# Kernel A: fused k/v projection + feature map + (S, Z) state accumulation
# ----------------------------------------------------------------------------
def _project_kv(blk, lk, cdt, s, k_ref, v_ref, wk_ref, bk_ref, wv_ref, bv_ref):
    k = jnp.dot(k_ref[0].astype(cdt), wk_ref[...],
                preferred_element_type=jnp.float32) + bk_ref[...]
    kf = jnp.where(k > 0, k + 1.0, jnp.exp(k))                # elu(k) + 1
    v = jnp.dot(v_ref[0].astype(cdt), wv_ref[...],
                preferred_element_type=jnp.float32) + bv_ref[...]
    if lk % blk != 0:                                          # static: ragged tail
        row = s * blk + jax.lax.broadcasted_iota(jnp.int32, (blk, 1), 0)
        valid = row < lk
        kf = jnp.where(valid, kf, 0.0)
        v = jnp.where(valid, v, 0.0)
    return kf, v


def _kv_state_blockdiag_kernel(blk, lk, cdt,
                               k_ref, v_ref, wk_ref, bk_ref, wv_ref, bv_ref,
                               mask_ref, t_ref, z_ref, t_acc):
    s = pl.program_id(1)

    @pl.when(s == 0)
    def _():
        t_acc[...] = jnp.zeros_like(t_acc)
        z_ref[...] = jnp.zeros_like(z_ref)

    kf, v = _project_kv(blk, lk, cdt, s, k_ref, v_ref, wk_ref, bk_ref, wv_ref, bv_ref)

    # T[(h,d),(h',m)] += sum_s Kf[s,(h,d)] * V[s,(h',m)] (block diag kept below)
    # TODO(synk): confirm in the Mosaic dump this transposed-LHS contraction
    #             does not lower to a per-step XLU transpose.
    t_acc[...] += jax.lax.dot_general(
        kf.astype(cdt), v.astype(cdt), (((0,), (0,)), ((), ())),
        preferred_element_type=jnp.float32)
    z_ref[0] += jnp.sum(kf, axis=0, keepdims=True)

    @pl.when(s == pl.num_programs(1) - 1)
    def _():
        # keep only the per-head block diagonal; single cast to compute dtype
        t_ref[0] = (t_acc[...] * mask_ref[...]).astype(t_ref.dtype)


def _kv_state_perhead_kernel(blk, lk, n_head, head_dim, cdt,
                             k_ref, v_ref, wk_ref, bk_ref, wv_ref, bv_ref,
                             t_ref, z_ref, t_acc):
    s = pl.program_id(1)

    @pl.when(s == 0)
    def _():
        t_acc[...] = jnp.zeros_like(t_acc)
        z_ref[...] = jnp.zeros_like(z_ref)

    kf, v = _project_kv(blk, lk, cdt, s, k_ref, v_ref, wk_ref, bk_ref, wv_ref, bv_ref)

    kf_c = kf.astype(cdt)
    v_c = v.astype(cdt)
    for h in range(n_head):                                    # static unroll
        sl = slice(h * head_dim, (h + 1) * head_dim)           # 128-aligned lane slice
        t_acc[h] += jax.lax.dot_general(
            kf_c[:, sl], v_c[:, sl], (((0,), (0,)), ((), ())),
            preferred_element_type=jnp.float32)
    z_ref[0] += jnp.sum(kf, axis=0, keepdims=True)

    @pl.when(s == pl.num_programs(1) - 1)
    def _():
        t_ref[0] = t_acc[...].astype(t_ref.dtype)


# ----------------------------------------------------------------------------
# Kernel B: fused q projection + feature map + attention read-out + o_proj
# ----------------------------------------------------------------------------
def _project_q(head_dim, cdt, q_ref, wq_ref, bq_ref):
    scaling = float(head_dim) ** -0.5
    q = jnp.dot(q_ref[0].astype(cdt), wq_ref[...],
                preferred_element_type=jnp.float32)
    q = (q + bq_ref[...]) * scaling
    return jnp.where(q > 0, q + 1.0, jnp.exp(q))               # elu(q*scale) + 1


def _den_f32(qf, z_ref, hsel_ref, hselt_ref):
    # den[i,(h,m)] = sum_d Qf[i,(h,d)] * Z[(h,d)], via two tiny f32 matmuls:
    # (blq,D)@(D,H) per-head sums, then (blq,H)@(H,D) lane-dense broadcast back.
    den_h = jnp.dot(qf * z_ref[0], hsel_ref[...],
                    preferred_element_type=jnp.float32)
    return jnp.dot(den_h, hselt_ref[...], preferred_element_type=jnp.float32)


def _q_attn_o_blockdiag_kernel(eps, head_dim, cdt, approx_recip,
                               q_ref, wq_ref, bq_ref, t_ref, z_ref,
                               hsel_ref, hselt_ref, wo_ref, bo_ref, o_ref):
    qf = _project_q(head_dim, cdt, q_ref, wq_ref, bq_ref)

    # num[i,(h,m)] = sum_d Qf[i,(h,d)] * T[(h,d),(h,m)]  (T already block-diag, cdt)
    num = jnp.dot(qf.astype(cdt), t_ref[0], preferred_element_type=jnp.float32)
    den = _den_f32(qf, z_ref, hsel_ref, hselt_ref)

    attn = num * pl.reciprocal(den + eps, approx=approx_recip)
    y = jnp.dot(attn.astype(cdt), wo_ref[...],
                preferred_element_type=jnp.float32) + bo_ref[...]
    o_ref[0] = y.astype(o_ref.dtype)


def _q_attn_o_perhead_kernel(eps, n_head, head_dim, cdt, approx_recip,
                             q_ref, wq_ref, bq_ref, t_ref, z_ref,
                             hsel_ref, hselt_ref, wo_ref, bo_ref, o_ref):
    qf = _project_q(head_dim, cdt, q_ref, wq_ref, bq_ref)

    qf_c = qf.astype(cdt)
    pieces = []
    for h in range(n_head):                                    # static unroll
        sl = slice(h * head_dim, (h + 1) * head_dim)           # 128-aligned lane slice
        pieces.append(jnp.dot(qf_c[:, sl], t_ref[0, h],
                              preferred_element_type=jnp.float32))
    num = jnp.concatenate(pieces, axis=-1)
    den = _den_f32(qf, z_ref, hsel_ref, hselt_ref)

    attn = num * pl.reciprocal(den + eps, approx=approx_recip)
    y = jnp.dot(attn.astype(cdt), wo_ref[...],
                preferred_element_type=jnp.float32) + bo_ref[...]
    o_ref[0] = y.astype(o_ref.dtype)


# ----------------------------------------------------------------------------
# Full layer forward
# ----------------------------------------------------------------------------
def recurrent_cross_attention_layer(params, querys, keys, values, *, n_head,
                                    eps=1e-6, compute_dtype=jnp.bfloat16,
                                    block_lq=256, block_lk=256):
    """block_lq/block_lk: raise to 512/1024 on 128-MiB-VMEM parts (v5e/v6e);
    the 256 default keeps double-buffered tiles comfortable on v7x (64 MiB)."""
    B, Lq, D = querys.shape
    Lk = keys.shape[1]
    assert D % n_head == 0
    hd = D // n_head
    cdt = jnp.dtype(compute_dtype)
    approx_recip = cdt != jnp.dtype(jnp.float32)
    per_head = (hd % 128 == 0)        # lane-dense per-head blocks: skip (D,D) trick

    blq = _choose_block(Lq, block_lq)
    blk = _choose_block(Lk, block_lk)
    n_sq = pl.cdiv(Lq, blq)
    n_sk = pl.cdiv(Lk, blk)

    hsel = _head_select(D, n_head)                       # (D, H) f32, host, once
    hsel_t = jnp.transpose(hsel)                         # (H, D) f32, host, once

    in_sz = jnp.dtype(querys.dtype).itemsize
    cdt_sz = cdt.itemsize

    # ---------------------------------------------------------------- Kernel A
    if per_head:
        t_shape = (B, n_head, hd, hd)
        t_out_spec = pl.BlockSpec((1, n_head, hd, hd), lambda b, s: (b, 0, 0, 0))
        t_scratch = pltpu.VMEM((n_head, hd, hd), jnp.float32)
        kernel_a = functools.partial(_kv_state_perhead_kernel, blk, Lk, n_head, hd, cdt)
        extra_in, extra_specs = (), []
        t_elems = n_head * hd * hd
    else:
        mask = _head_mask(D, hd)                          # (D, D) f32, host, once
        t_shape = (B, D, D)
        t_out_spec = pl.BlockSpec((1, D, D), lambda b, s: (b, 0, 0))
        t_scratch = pltpu.VMEM((D, D), jnp.float32)
        kernel_a = functools.partial(_kv_state_blockdiag_kernel, blk, Lk, cdt)
        extra_in = (mask,)
        extra_specs = [pl.BlockSpec((D, D), lambda b, s: (0, 0))]
        t_elems = D * D

    vmem_a = (2 * 2 * blk * D * in_sz                     # k, v tiles (double buffered)
              + 2 * 2 * D * D * cdt_sz                    # wk, wv
              + (0 if per_head else D * D * 4)            # block-diag mask
              + t_elems * 4                               # f32 accumulator scratch
              + 2 * (t_elems * cdt_sz + D * 4)            # T, Z outputs
              + (8 << 20))
    vmem_a = int(max(32 << 20, min(vmem_a, 100 << 20)))

    t_state, z_state = pl.pallas_call(
        kernel_a,
        out_shape=(jax.ShapeDtypeStruct(t_shape, cdt),
                   jax.ShapeDtypeStruct((B, 1, D), jnp.float32)),
        grid_spec=pltpu.PrefetchScalarGridSpec(
            num_scalar_prefetch=0,
            grid=(B, n_sk),
            in_specs=[
                pl.BlockSpec((1, blk, D), lambda b, s: (b, s, 0)),
                pl.BlockSpec((1, blk, D), lambda b, s: (b, s, 0)),
                pl.BlockSpec((D, D), lambda b, s: (0, 0)),
                pl.BlockSpec((1, D), lambda b, s: (0, 0)),
                pl.BlockSpec((D, D), lambda b, s: (0, 0)),
                pl.BlockSpec((1, D), lambda b, s: (0, 0)),
            ] + extra_specs,
            out_specs=(t_out_spec,
                       pl.BlockSpec((1, 1, D), lambda b, s: (b, 0, 0))),
            scratch_shapes=[t_scratch],
        ),
        compiler_params=pltpu.CompilerParams(
            dimension_semantics=("parallel", "arbitrary"),
            vmem_limit_bytes=vmem_a),
    )(keys, values, params["wk_t"], params["bk"], params["wv_t"], params["bv"],
      *extra_in)

    # ---------------------------------------------------------------- Kernel B
    if per_head:
        kernel_b = functools.partial(_q_attn_o_perhead_kernel, eps, n_head, hd,
                                     cdt, approx_recip)
        t_in_spec = pl.BlockSpec((1, n_head, hd, hd), lambda b, t: (b, 0, 0, 0))
    else:
        kernel_b = functools.partial(_q_attn_o_blockdiag_kernel, eps, hd, cdt,
                                     approx_recip)
        t_in_spec = pl.BlockSpec((1, D, D), lambda b, t: (b, 0, 0))

    vmem_b = (2 * blq * D * in_sz                          # q tiles
              + 2 * 2 * D * D * cdt_sz                     # wq, wo
              + 2 * t_elems * cdt_sz + 2 * D * 4           # T, Z
              + 2 * blq * D * in_sz                        # output tiles
              + (8 << 20))
    vmem_b = int(max(32 << 20, min(vmem_b, 100 << 20)))

    out = pl.pallas_call(
        kernel_b,
        out_shape=jax.ShapeDtypeStruct((B, Lq, D), querys.dtype),
        grid_spec=pltpu.PrefetchScalarGridSpec(
            num_scalar_prefetch=0,
            grid=(B, n_sq),
            in_specs=[
                pl.BlockSpec((1, blq, D), lambda b, t: (b, t, 0)),
                pl.BlockSpec((D, D), lambda b, t: (0, 0)),
                pl.BlockSpec((1, D), lambda b, t: (0, 0)),
                t_in_spec,
                pl.BlockSpec((1, 1, D), lambda b, t: (b, 0, 0)),
                pl.BlockSpec((D, n_head), lambda b, t: (0, 0)),
                pl.BlockSpec((n_head, D), lambda b, t: (0, 0)),
                pl.BlockSpec((D, D), lambda b, t: (0, 0)),
                pl.BlockSpec((1, D), lambda b, t: (0, 0)),
            ],
            out_specs=pl.BlockSpec((1, blq, D), lambda b, t: (b, t, 0)),
        ),
        compiler_params=pltpu.CompilerParams(
            dimension_semantics=("parallel", "parallel"),
            vmem_limit_bytes=vmem_b),
    )(querys, params["wq_t"], params["bq"], t_state, z_state, hsel, hsel_t,
      params["wo_t"], params["bo"])
    return out


# ----------------------------------------------------------------------------
# Pure-JAX reference (for correctness checks)
# ----------------------------------------------------------------------------
def _reference(params, querys, keys, values, *, n_head, eps=1e-6):
    B, Lq, D = querys.shape
    Lk = keys.shape[1]
    hd = D // n_head
    phi = lambda x: jnp.where(x > 0, x + 1.0, jnp.exp(x))
    q = (querys @ params["wq"].T + params["bq"]) * hd ** -0.5
    k = keys @ params["wk"].T + params["bk"]
    v = values @ params["wv"].T + params["bv"]
    Q = phi(q).reshape(B, Lq, n_head, hd)
    K = phi(k).reshape(B, Lk, n_head, hd)
    V = v.reshape(B, Lk, n_head, hd)
    S = jnp.einsum("bsnd,bsnm->bnmd", K, V)
    Z = K.sum(axis=1)
    num = jnp.einsum("bind,bnmd->binm", Q, S)
    den = jnp.einsum("bind,bnd->bin", Q, Z) + eps
    out = (num / den[..., None]).reshape(B, Lq, D)
    return out @ params["wo"].T + params["bo"]


def _make_case(seed, B, Lq, Lk, D):
    key = jax.random.PRNGKey(seed)
    ks = jax.random.split(key, 11)
    bound = (6.0 / (D + D)) ** 0.5  # xavier_uniform bound for (D, D) weights
    raw = {
        "wq": jax.random.uniform(ks[0], (D, D), jnp.float32, -bound, bound),
        "bq": jax.random.uniform(ks[1], (D,), jnp.float32, -0.1, 0.1),
        "wk": jax.random.uniform(ks[2], (D, D), jnp.float32, -bound, bound),
        "bk": jax.random.uniform(ks[3], (D,), jnp.float32, -0.1, 0.1),
        "wv": jax.random.uniform(ks[4], (D, D), jnp.float32, -bound, bound),
        "bv": jax.random.uniform(ks[5], (D,), jnp.float32, -0.1, 0.1),
        "wo": jax.random.uniform(ks[6], (D, D), jnp.float32, -bound, bound),
        "bo": jax.random.uniform(ks[7], (D,), jnp.float32, -0.1, 0.1),
    }
    querys = jax.random.normal(ks[8], (B, Lq, D), jnp.float32)
    keys_in = jax.random.normal(ks[9], (B, Lk, D), jnp.float32)
    values = jax.random.normal(ks[10], (B, Lq, D), jnp.float32)[:, :Lk]
    values = jax.random.normal(ks[10], (B, Lk, D), jnp.float32)
    return raw, querys, keys_in, values


def _max_rel_err(out, ref):
    out = jnp.asarray(out, jnp.float32)
    return float(jnp.max(jnp.abs(out - ref)) / (jnp.max(jnp.abs(ref)) + 1e-6))


if __name__ == "__main__":
    # --- Case 1: small d_model, hd < 128 -> block-diagonal path, even tiles.
    B, Lq, Lk, D, H = 2, 8, 8, 32, 4
    raw, qs, ks_in, vs = _make_case(0, B, Lq, Lk, D)
    ref = _reference(raw, qs, ks_in, vs, n_head=H)

    p32 = prepare_params(raw, compute_dtype=jnp.float32)
    out32 = recurrent_cross_attention_layer(
        p32, qs, ks_in, vs, n_head=H, compute_dtype=jnp.float32)
    out32 = jax.block_until_ready(out32)
    assert out32.shape == (B, Lq, D)
    assert jnp.allclose(out32, ref, atol=1e-4, rtol=1e-4), "case1 f32 mismatch"

    pbf = prepare_params(raw, compute_dtype=jnp.bfloat16)
    outbf = recurrent_cross_attention_layer(
        pbf, qs, ks_in, vs, n_head=H, compute_dtype=jnp.bfloat16)
    outbf = jax.block_until_ready(outbf)
    assert _max_rel_err(outbf, ref) < 5e-2, "case1 bf16 mismatch"

    # bf16 activations fed straight to the kernels (halves input DMA bytes).
    outbf_in = recurrent_cross_attention_layer(
        pbf, qs.astype(jnp.bfloat16), ks_in.astype(jnp.bfloat16),
        vs.astype(jnp.bfloat16), n_head=H, compute_dtype=jnp.bfloat16)
    outbf_in = jax.block_until_ready(outbf_in)
    assert _max_rel_err(outbf_in, ref) < 5e-2, "case1 bf16-input mismatch"

    # --- Case 2: hd = 128 -> per-head path; ragged Lq/Lk (320 % 256 != 0).
    B2, Lq2, Lk2, D2, H2 = 1, 320, 320, 256, 2
    raw2, qs2, ks2, vs2 = _make_case(1, B2, Lq2, Lk2, D2)
    ref2 = _reference(raw2, qs2, ks2, vs2, n_head=H2)

    p32_2 = prepare_params(raw2, compute_dtype=jnp.float32)
    out32_2 = recurrent_cross_attention_layer(
        p32_2, qs2, ks2, vs2, n_head=H2, compute_dtype=jnp.float32)
    out32_2 = jax.block_until_ready(out32_2)
    assert out32_2.shape == (B2, Lq2, D2)
    assert jnp.allclose(out32_2, ref2, atol=5e-4, rtol=5e-4), "case2 f32 mismatch"

    pbf_2 = prepare_params(raw2, compute_dtype=jnp.bfloat16)
    outbf_2 = recurrent_cross_attention_layer(
        pbf_2, qs2, ks2, vs2, n_head=H2, compute_dtype=jnp.bfloat16)
    outbf_2 = jax.block_until_ready(outbf_2)
    assert _max_rel_err(outbf_2, ref2) < 5e-2, "case2 bf16 mismatch"

    print("KERNEL_OK")
</pallas_src>

<mosaic_0001>
module attributes {stable_mosaic.version = 11 : i64} {
  func.func @_kv_state_blockdiag_kernel(%arg0: i32, %arg1: i32, %arg2: memref<1x8x32xf32, #tpu.memory_space<vmem>>, %arg3: memref<1x8x32xf32, #tpu.memory_space<vmem>>, %arg4: memref<32x32xf32, #tpu.memory_space<vmem>>, %arg5: memref<1x32xf32, #tpu.memory_space<vmem>>, %arg6: memref<32x32xf32, #tpu.memory_space<vmem>>, %arg7: memref<1x32xf32, #tpu.memory_space<vmem>>, %arg8: memref<32x32xf32, #tpu.memory_space<vmem>>, %arg9: memref<1x32x32xf32, #tpu.memory_space<vmem>>, %arg10: memref<1x1x32xf32, #tpu.memory_space<vmem>>, %arg11: memref<32x32xf32, #tpu.memory_space<vmem>>) attributes {dimension_semantics = [#tpu.dimension_semantics<parallel>, #tpu.dimension_semantics<arbitrary>], iteration_bounds = array<i64: 2, 1>, scalar_prefetch = 0 : i64, scratch_operands = 1 : i64, tpu.core_type = #tpu.core_type<tc>, window_params = [{transform_indices = @transform_0, window_bounds = array<i64: 1, 8, 32>}, {transform_indices = @transform_1, window_bounds = array<i64: 1, 8, 32>}, {pipeline_mode = #tpu.pipeline_mode<synchronous>, transform_indices = @transform_2, window_bounds = array<i64: 32, 32>}, {pipeline_mode = #tpu.pipeline_mode<synchronous>, transform_indices = @transform_3, window_bounds = array<i64: 1, 32>}, {pipeline_mode = #tpu.pipeline_mode<synchronous>, transform_indices = @transform_4, window_bounds = array<i64: 32, 32>}, {pipeline_mode = #tpu.pipeline_mode<synchronous>, transform_indices = @transform_5, window_bounds = array<i64: 1, 32>}, {pipeline_mode = #tpu.pipeline_mode<synchronous>, transform_indices = @transform_6, window_bounds = array<i64: 32, 32>}, {transform_indices = @transform_7, window_bounds = array<i64: 1, 32, 32>}, {transform_indices = @transform_8, window_bounds = array<i64: 1, 1, 32>}]} {
    %c0_i32 = arith.constant 0 : i32
    %0 = arith.cmpi eq, %arg1, %c0_i32 : i32
    %1 = arith.extui %0 : i1 to i32
    %c0_i32_0 = arith.constant 0 : i32
    %2 = arith.cmpi ne, %1, %c0_i32_0 : i32
    scf.if %2 {
      %cst_31 = arith.constant 0.000000e+00 : f32
      %38 = vector.broadcast %cst_31 : f32 to vector<32x32xf32>
      %c0_32 = arith.constant 0 : index
      %c0_33 = arith.constant 0 : index
      %39 = vector.load %arg11[%c0_32, %c0_33] : memref<32x32xf32, #tpu.memory_space<vmem>>, vector<32x32xf32>
      tpu.vector_store %arg11[%c0_32, %c0_33], %38 {strides = array<i32>} : memref<32x32xf32, #tpu.memory_space<vmem>>, vector<32x32xf32>,
      %cst_34 = arith.constant 0.000000e+00 : f32
      %40 = vector.broadcast %cst_34 : f32 to vector<1x1x32xf32>
      %c0_35 = arith.constant 0 : index
      %c0_36 = arith.constant 0 : index
      %c0_37 = arith.constant 0 : index
      %41 = vector.load %arg10[%c0_35, %c0_36, %c0_37] : memref<1x1x32xf32, #tpu.memory_space<vmem>>, vector<1x1x32xf32>
      tpu.vector_store %arg10[%c0_35, %c0_36, %c0_37], %40 {strides = array<i32>} : memref<1x1x32xf32, #tpu.memory_space<vmem>>, vector<1x1x32xf32>,
    } else {
    }
    %c0 = arith.constant 0 : index
    %c0_1 = arith.constant 0 : index
    %c0_2 = arith.constant 0 : index
    %3 = vector.load %arg2[%c0, %c0_1, %c0_2] : memref<1x8x32xf32, #tpu.memory_space<vmem>>, vector<1x8x32xf32>
    %4 = vector.shape_cast %3 : vector<1x8x32xf32> to vector<8x32xf32>
    %c0_3 = arith.constant 0 : index
    %c0_4 = arith.constant 0 : index
    %5 = vector.load %arg4[%c0_3, %c0_4] : memref<32x32xf32, #tpu.memory_space<vmem>>, vector<32x32xf32>
    %cst = arith.constant dense<0.000000e+00> : vector<8x32xf32>
    %6 = tpu.matmul %4, %5, %cst {dimension_numbers = #tpu.dot_dimension_numbers<[1], [0], [0], [1], [0, 0, 1, 1], [], []>} : vector<8x32xf32>, vector<32x32xf32>, vector<8x32xf32> -> vector<8x32xf32>
    %c0_5 = arith.constant 0 : index
    %c0_6 = arith.constant 0 : index
    %7 = vector.load %arg5[%c0_5, %c0_6] : memref<1x32xf32, #tpu.memory_space<vmem>>, vector<1x32xf32>
    %8 = vector.broadcast %7 : vector<1x32xf32> to vector<8x32xf32>
    %9 = arith.addf %6, %8 : vector<8x32xf32>
    %cst_7 = arith.constant 0.000000e+00 : f32
    %10 = vector.broadcast %cst_7 : f32 to vector<8x32xf32>
    %11 = arith.cmpf ogt, %9, %10 : vector<8x32xf32>
    %cst_8 = arith.constant 1.000000e+00 : f32
    %12 = vector.broadcast %cst_8 : f32 to vector<8x32xf32>
    %13 = arith.addf %9, %12 : vector<8x32xf32>
    %14 = math.exp %9 : vector<8x32xf32>
    %15 = arith.select %11, %13, %14 : vector<8x32xi1>, vector<8x32xf32>
    %c0_9 = arith.constant 0 : index
    %c0_10 = arith.constant 0 : index
    %c0_11 = arith.constant 0 : index
    %16 = vector.load %arg3[%c0_9, %c0_10, %c0_11] : memref<1x8x32xf32, #tpu.memory_space<vmem>>, vector<1x8x32xf32>
    %17 = vector.shape_cast %16 : vector<1x8x32xf32> to vector<8x32xf32>
    %c0_12 = arith.constant 0 : index
    %c0_13 = arith.constant 0 : index
    %18 = vector.load %arg6[%c0_12, %c0_13] : memref<32x32xf32, #tpu.memory_space<vmem>>, vector<32x32xf32>
    %cst_14 = arith.constant dense<0.000000e+00> : vector<8x32xf32>
    %19 = tpu.matmul %17, %18, %cst_14 {dimension_numbers = #tpu.dot_dimension_numbers<[1], [0], [0], [1], [0, 0, 1, 1], [], []>} : vector<8x32xf32>, vector<32x32xf32>, vector<8x32xf32> -> vector<8x32xf32>
    %c0_15 = arith.constant 0 : index
    %c0_16 = arith.constant 0 : index
    %20 = vector.load %arg7[%c0_15, %c0_16] : memref<1x32xf32, #tpu.memory_space<vmem>>, vector<1x32xf32>
    %21 = vector.broadcast %20 : vector<1x32xf32> to vector<8x32xf32>
    %22 = arith.addf %19, %21 : vector<8x32xf32>
    %c0_17 = arith.constant 0 : index
    %c0_18 = arith.constant 0 : index
    %23 = vector.load %arg11[%c0_17, %c0_18] : memref<32x32xf32, #tpu.memory_space<vmem>>, vector<32x32xf32>
    %cst_19 = arith.constant dense<0.000000e+00> : vector<32x32xf32>
    %24 = tpu.matmul %15, %22, %cst_19 {dimension_numbers = #tpu.dot_dimension_numbers<[0], [0], [1], [1], [0, 1, 1, 1], [], []>} : vector<8x32xf32>, vector<8x32xf32>, vector<32x32xf32> -> vector<32x32xf32>
    %25 = arith.addf %23, %24 : vector<32x32xf32>
    %c0_20 = arith.constant 0 : index
    %c0_21 = arith.constant 0 : index
    %26 = vector.load %arg11[%c0_20, %c0_21] : memref<32x32xf32, #tpu.memory_space<vmem>>, vector<32x32xf32>
    tpu.vector_store %arg11[%c0_20, %c0_21], %25 {strides = array<i32>} : memref<32x32xf32, #tpu.memory_space<vmem>>, vector<32x32xf32>,
    %c0_22 = arith.constant 0 : index
    %c0_23 = arith.constant 0 : index
    %c0_24 = arith.constant 0 : index
    %27 = vector.load %arg10[%c0_22, %c0_23, %c0_24] : memref<1x1x32xf32, #tpu.memory_space<vmem>>, vector<1x1x32xf32>
    %28 = vector.shape_cast %27 : vector<1x1x32xf32> to vector<1x32xf32>
    %cst_25 = arith.constant dense<0.000000e+00> : vector<32xf32>
    %29 = vector.multi_reduction <add>, %15, %cst_25 [0] : vector<8x32xf32> to vector<32xf32>
    %30 = vector.shape_cast %29 : vector<32xf32> to vector<1x32xf32>
    %31 = arith.addf %28, %30 : vector<1x32xf32>
    %c0_26 = arith.constant 0 : index
    %c0_27 = arith.constant 0 : index
    %c0_28 = arith.constant 0 : index
    %32 = vector.load %arg10[%c0_26, %c0_27, %c0_28] : memref<1x1x32xf32, #tpu.memory_space<vmem>>, vector<1x1x32xf32>
    %33 = vector.shape_cast %32 : vector<1x1x32xf32> to vector<1x32xf32>
    %34 = vector.shape_cast %31 : vector<1x32xf32> to vector<1x1x32xf32>
    tpu.vector_store %arg10[%c0_26, %c0_27, %c0_28], %34 {strides = array<i32>} : memref<1x1x32xf32, #tpu.memory_space<vmem>>, vector<1x1x32xf32>,
    %c0_i32_29 = arith.constant 0 : i32
    %35 = arith.cmpi eq, %arg1, %c0_i32_29 : i32
    %36 = arith.extui %35 : i1 to i32
    %c0_i32_30 = arith.constant 0 : i32
    %37 = arith.cmpi ne, %36, %c0_i32_30 : i32
    scf.if %37 {
      %c0_31 = arith.constant 0 : index
      %c0_32 = arith.constant 0 : index
      %38 = vector.load %arg11[%c0_31, %c0_32] : memref<32x32xf32, #tpu.memory_space<vmem>>, vector<32x32xf32>
      %c0_33 = arith.constant 0 : index
      %c0_34 = arith.constant 0 : index
      %39 = vector.load %arg8[%c0_33, %c0_34] : memref<32x32xf32, #tpu.memory_space<vmem>>, vector<32x32xf32>
      %40 = arith.mulf %38, %39 : vector<32x32xf32>
      %c0_35 = arith.constant 0 : index
      %c0_36 = arith.constant 0 : index
      %c0_37 = arith.constant 0 : index
      %41 = vector.load %arg9[%c0_35, %c0_36, %c0_37] : memref<1x32x32xf32, #tpu.memory_space<vmem>>, vector<1x32x32xf32>
      %42 = vector.shape_cast %41 : vector<1x32x32xf32> to vector<32x32xf32>
      %43 = vector.shape_cast %40 : vector<32x32xf32> to vector<1x32x32xf32>
      tpu.vector_store %arg9[%c0_35, %c0_36, %c0_37], %43 {strides = array<i32>} : memref<1x32x32xf32, #tpu.memory_space<vmem>>, vector<1x32x32xf32>,
    } else {
    }
    return
  }
  func.func @transform_0(%arg0: i32, %arg1: i32) -> (i32, i32, i32) {
    %c0_i32 = arith.constant 0 : i32
    %c0_i32_0 = arith.constant 0 : i32
    return %arg0, %arg1, %c0_i32 : i32, i32, i32
  }
  func.func @transform_1(%arg0: i32, %arg1: i32) -> (i32, i32, i32) {
    %c0_i32 = arith.constant 0 : i32
    %c0_i32_0 = arith.constant 0 : i32
    return %arg0, %arg1, %c0_i32 : i32, i32, i32
  }
  func.func @transform_2(%arg0: i32, %arg1: i32) -> (i32, i32) {
    %c0_i32 = arith.constant 0 : i32
    %c0_i32_0 = arith.constant 0 : i32
    %c0_i32_1 = arith.constant 0 : i32
    return %c0_i32, %c0_i32_0 : i32, i32
  }
  func.func @transform_3(%arg0: i32, %arg1: i32) -> (i32, i32) {
    %c0_i32 = arith.constant 0 : i32
    %c0_i32_0 = arith.constant 0 : i32
    %c0_i32_1 = arith.constant 0 : i32
    return %c0_i32, %c0_i32_0 : i32, i32
  }
  func.func @transform_4(%arg0: i32, %arg1: i32) -> (i32, i32) {
    %c0_i32 = arith.constant 0 : i32
    %c0_i32_0 = arith.constant 0 : i32
    %c0_i32_1 = arith.constant 0 : i32
    return %c0_i32, %c0_i32_0 : i32, i32
  }
  func.func @transform_5(%arg0: i32, %arg1: i32) -> (i32, i32) {
    %c0_i32 = arith.constant 0 : i32
    %c0_i32_0 = arith.constant 0 : i32
    %c0_i32_1 = arith.constant 0 : i32
    return %c0_i32, %c0_i32_0 : i32, i32
  }
  func.func @transform_6(%arg0: i32, %arg1: i32) -> (i32, i32) {
    %c0_i32 = arith.constant 0 : i32
    %c0_i32_0 = arith.constant 0 : i32
    %c0_i32_1 = arith.constant 0 : i32
    return %c0_i32, %c0_i32_0 : i32, i32
  }
  func.func @transform_7(%arg0: i32, %arg1: i32) -> (i32, i32, i32) {
    %c0_i32 = arith.constant 0 : i32
    %c0_i32_0 = arith.constant 0 : i32
    %c0_i32_1 = arith.constant 0 : i32
    return %arg0, %c0_i32, %c0_i32_0 : i32, i32, i32
  }
  func.func @transform_8(%arg0: i32, %arg1: i32) -> (i32, i32, i32) {
    %c0_i32 = arith.constant 0 : i32
    %c0_i32_0 = arith.constant 0 : i32
    %c0_i32_1 = arith.constant 0 : i32
    return %arg0, %c0_i32, %c0_i32_0 : i32, i32, i32
  }
}

</mosaic_0001>

<llo_original>
// kernel: tpu_custom_call.1
$region0: #{tpu_custom_call.1}
  #allocation0 [shape = 'u32[]', space=smem, size = 0x4, offset = 0x4, fixed_abs, tag = 'smem constant byte address 0x4 - core index']
  #allocation1 [shape = 'u32[144,128]{1,0:T(1,128)}', space=vmem, size = 0x12000, scoped, tag = 'internal scratch']
  #allocation2 [shape = 'f32[32,32]{1,0:T(8,128)}', space=vmem, size = 0x4000, scoped, tag = 'scratch operand']
  %s0 = inlined_call_operand.hbm [shape: f32[2,8,32], index: 0, kind: input, shape index: {}]
  %s1 = inlined_call_operand.hbm [shape: f32[2,8,32], index: 1, kind: input, shape index: {}]
  %s2 = inlined_call_operand.hbm [shape: f32[32,32], index: 2, kind: input, shape index: {}]
  %s3 = inlined_call_operand.vmem [shape: f32[1,32], index: 3, kind: input, shape index: {}]
  %s4 = inlined_call_operand.hbm [shape: f32[32,32], index: 4, kind: input, shape index: {}]
  %s5 = inlined_call_operand.vmem [shape: f32[1,32], index: 5, kind: input, shape index: {}]
  %s6 = inlined_call_operand.hbm [shape: f32[32,32], index: 6, kind: input, shape index: {}]
  %s7 = inlined_call_operand.hbm [shape: f32[2,32,32], index: 7, kind: output, shape index: {0}]
  %s8 = inlined_call_operand.hbm [shape: f32[2,1,32], index: 8, kind: output, shape index: {1}]
  %9 = xla_tuple %s7, %s8
  %s10 = sld [smem:[#allocation0]]
  $region97: #{tpu_custom_call.1} parent=0
    _
  %s12 = ssub.s32 1, %s10
  %s13 = scalar_select 0, %s12, %s10
  $region1: #{tpu_custom_call.1} parent=0
    #allocation3 [shape = 'u8[8192]{0}', space=vmem, size = 0x2000, scoped, tag = 'input window, operand 0']
    #allocation4 [shape = 's32[2]{0}', space=sflag, size = 0x8, scoped, tag = 'scoped memory for tpu_custom_call.1']
    #allocation5 [shape = 's32[2]{0}', space=sflag, size = 0x8, scoped, tag = 'scoped memory for tpu_custom_call.1']
    #allocation6 [shape = 'u8[8192]{0}', space=vmem, size = 0x2000, scoped, tag = 'input window, operand 1']
    #allocation7 [shape = 's32[2]{0}', space=sflag, size = 0x8, scoped, tag = 'scoped memory for tpu_custom_call.1']
    #allocation8 [shape = 'u8[16384]{0}', space=vmem, size = 0x4000, scoped, tag = 'input window, operand 2, single buffered']
    #allocation9 [shape = 'u8[16384]{0}', space=vmem, size = 0x4000, scoped, tag = 'input window, operand 4, single buffered']
    #allocation10 [shape = 's32[1]{0}', space=sflag, size = 0x4, scoped, tag = 'scoped memory for tpu_custom_call.1']
    #allocation11 [shape = 'u8[16384]{0}', space=vmem, size = 0x4000, scoped, tag = 'input window, operand 6, single buffered']
    #allocation12 [shape = 'u8[32768]{0}', space=vmem, size = 0x8000, scoped, tag = 'output window, operand 0']
    #allocation13 [shape = 'u8[1024]{0}', space=vmem, size = 0x400, scoped, tag = 'output window, operand 1']
    #allocation14 [shape = 's32[2]{0}', space=sflag, size = 0x8, scoped, tag = 'scoped memory for tpu_custom_call.1']
    %14 = vsyncpa [#allocation4], 0
    %s15 = scalar_lea.sflag [#allocation4], 1
    %16 = vsyncpa %s15, 0
    %17 = vsyncpa [#allocation7], 0
    %s18 = scalar_lea.sflag [#allocation7], 1
    %19 = vsyncpa %s18, 0
    %20 = vsyncpa [#allocation10], 0
    %21 = vsyncpa [#allocation5], 0
    %s22 = scalar_lea.sflag [#allocation5], 1
    %23 = vsyncpa %s22, 0
    %24 = vsyncpa [#allocation14], 0
    %s25 = scalar_lea.sflag [#allocation14], 1
    %26 = vsyncpa %s25, 0
    loop: start=0, step=1, limit=4
    $region2: #{tpu_custom_call.1} parent=1 // loop_pre_header
      _
    $region3: #{tpu_custom_call.1} parent=1 // loop_header
      %s28 = sphi 0, %s32
      %p29 = scmp.ge.s32.totalorder %s28, 4
      %s35 = sphi 0, %s47
      %s36 = sphi 0, %s43
      %s37 = sphi 0, %s35
      %s38 = sphi 0, %s36
      %s39 = sphi 0, %s37
      %s40 = sphi 0, %s38
      %s52 = sphi 0, %s54
      %s55 = sphi 0, %s52
      %s56 = sphi 0, %s55
      %s72 = sphi 0, %s56
      %s80 = sphi 0, %s82
      %s83 = sphi 0, %s80
      %s84 = sphi 0, %s83
      %s100 = sphi 0, %s84
      %s104 = sphi 0, %s104
      %s106 = sphi 0, %s104
      %s107 = sphi 0, %s106
      %s121 = sphi 0, %s107
      %s125 = sphi 0, %s125
      %s127 = sphi 0, %s125
      %s128 = sphi 0, %s127
      %s142 = sphi 0, %s128
      %s146 = sphi 0, %s146
      %s148 = sphi 0, %s146
      %s149 = sphi 0, %s148
      %s163 = sphi 0, %s149
      %s167 = sphi 0, %s167
      %s169 = sphi 0, %s167
      %s170 = sphi 0, %s169
      %s184 = sphi 0, %s170
      %s188 = sphi 0, %s188
      %s190 = sphi 0, %s188
      %s191 = sphi 0, %s190
      %s205 = sphi 0, %s191
      %s211 = sphi 0, %s213
      %s214 = sphi 0, %s211
      %s215 = sphi 0, %s214
      %s231 = sphi 0, %s215
      %s237 = sphi 0, %s239
      %s240 = sphi 0, %s237
      %s241 = sphi 0, %s240
      %s257 = sphi 0, %s241
    $region4: #{tpu_custom_call.1} parent=1 // loop_header_branch
      %31 = sbr.rel (%p29) target = $region8
    $region5: #{tpu_custom_call.1} parent=1 // loop_body
      %s33 = ssub.s32 %s28, 1
      %s34 = ssub.s32 %s28, 2
      %s41 = sadd.s32 1, %s36
      %p42 = scmp.ge.s32.totalorder %s41, 1
      %s43 = scalar_select %p42, 0, %s41
      %s44 = sadd.s32 1, %s35
      %s45 = scalar_select %p42, %s44, %s35
      %p46 = scmp.ge.s32.totalorder %s45, 2
      %s47 = scalar_select %p46, 0, %s45
      %s48 = ssub.s32 %s35, %s47
      %s49 = ssub.s32 %s36, %s43
      %s50 = sor.u32 %s48, %s49
      %p51 = scmp.eq.s32.totalorder %s50, 0
      %s53 = sadd.s32 %s52, 1
      %s54 = scalar_select %p51, %s52, %s53
      %p57 = pneg %p51
      %p58 = scmp.eq.s32.totalorder %s28, 1
      %p59 = por %p57, %p58
      %p60 = scmp.ne.s32.totalorder %s52, %s55
      %p61 = scmp.eq.s32.totalorder %s28, 0
      %p62 = por %p60, %p61
      %p63 = scmp.ne.s32.totalorder %s52, %s55
      %p64 = scmp.eq.s32.totalorder %s33, 1
      %p65 = por %p63, %p64
      %p66 = scmp.ne.s32.totalorder %s55, %s56
      %p67 = scmp.eq.s32.totalorder %s33, 0
      %p68 = por %p66, %p67
      %p69 = scmp.ne.s32.totalorder %s55, %s56
      %p70 = scmp.eq.s32.totalorder %s34, 1
      %p71 = por %p69, %p70
      %p73 = scmp.ne.s32.totalorder %s56, %s72
      %p74 = scmp.eq.s32.totalorder %s34, 0
      %p75 = por %p73, %p74
      %s76 = ssub.s32 %s35, %s47
      %s77 = ssub.s32 %s36, %s43
      %s78 = sor.u32 %s76, %s77
      %p79 = scmp.eq.s32.totalorder %s78, 0
      %s81 = sadd.s32 %s80, 1
      %s82 = scalar_select %p79, %s80, %s81
      %p85 = pneg %p79
      %p86 = scmp.eq.s32.totalorder %s28, 1
      %p87 = por %p85, %p86
      %p88 = scmp.ne.s32.totalorder %s80, %s83
      %p89 = scmp.eq.s32.totalorder %s28, 0
      %p90 = por %p88, %p89
      %p91 = scmp.ne.s32.totalorder %s80, %s83
      %p92 = scmp.eq.s32.totalorder %s33, 1
      %p93 = por %p91, %p92
      %p94 = scmp.ne.s32.totalorder %s83, %s84
      %p95 = scmp.eq.s32.totalorder %s33, 0
      %p96 = por %p94, %p95
      %p97 = scmp.ne.s32.totalorder %s83, %s84
      %p98 = scmp.eq.s32.totalorder %s34, 1
      %p99 = por %p97, %p98
      %p101 = scmp.ne.s32.totalorder %s84, %s100
      %p102 = scmp.eq.s32.totalorder %s34, 0
      %p103 = por %p101, %p102
      %s105 = sadd.s32 %s104, 1
      %p108 = scmp.eq.s32.totalorder %s28, 1
      %p109 = scmp.ne.s32.totalorder %s104, %s106
      %p110 = scmp.eq.s32.totalorder %s28, 0
      %p111 = por %p109, %p110
      %p112 = scmp.ne.s32.totalorder %s104, %s106
      %p113 = scmp.eq.s32.totalorder %s33, 1
      %p114 = por %p112, %p113
      %p115 = scmp.ne.s32.totalorder %s106, %s107
      %p116 = scmp.eq.s32.totalorder %s33, 0
      %p117 = por %p115, %p116
      %p118 = scmp.ne.s32.totalorder %s106, %s107
      %p119 = scmp.eq.s32.totalorder %s34, 1
      %p120 = por %p118, %p119
      %p122 = scmp.ne.s32.totalorder %s107, %s121
      %p123 = scmp.eq.s32.totalorder %s34, 0
      %p124 = por %p122, %p123
      %s126 = sadd.s32 %s125, 1
      %p129 = scmp.eq.s32.totalorder %s28, 1
      %p130 = scmp.ne.s32.totalorder %s125, %s127
      %p131 = scmp.eq.s32.totalorder %s28, 0
      %p132 = por %p130, %p131
      %p133 = scmp.ne.s32.totalorder %s125, %s127
      %p134 = scmp.eq.s32.totalorder %s33, 1
      %p135 = por %p133, %p134
      %p136 = scmp.ne.s32.totalorder %s127, %s128
      %p137 = scmp.eq.s32.totalorder %s33, 0
      %p138 = por %p136, %p137
      %p139 = scmp.ne.s32.totalorder %s127, %s128
      %p140 = scmp.eq.s32.totalorder %s34, 1
      %p141 = por %p139, %p140
      %p143 = scmp.ne.s32.totalorder %s128, %s142
      %p144 = scmp.eq.s32.totalorder %s34, 0
      %p145 = por %p143, %p144
      %s147 = sadd.s32 %s146, 1
      %p150 = scmp.eq.s32.totalorder %s28, 1
      %p151 = scmp.ne.s32.totalorder %s146, %s148
      %p152 = scmp.eq.s32.totalorder %s28, 0
      %p153 = por %p151, %p152
      %p154 = scmp.ne.s32.totalorder %s146, %s148
      %p155 = scmp.eq.s32.totalorder %s33, 1
      %p156 = por %p154, %p155
      %p157 = scmp.ne.s32.totalorder %s148, %s149
      %p158 = scmp.eq.s32.totalorder %s33, 0
      %p159 = por %p157, %p158
      %p160 = scmp.ne.s32.totalorder %s148, %s149
      %p161 = scmp.eq.s32.totalorder %s34, 1
      %p162 = por %p160, %p161
      %p164 = scmp.ne.s32.totalorder %s149, %s163
      %p165 = scmp.eq.s32.totalorder %s34, 0
      %p166 = por %p164, %p165
      %s168 = sadd.s32 %s167, 1
      %p171 = scmp.eq.s32.totalorder %s28, 1
      %p172 = scmp.ne.s32.totalorder %s167, %s169
      %p173 = scmp.eq.s32.totalorder %s28, 0
      %p174 = por %p172, %p173
      %p175 = scmp.ne.s32.totalorder %s167, %s169
      %p176 = scmp.eq.s32.totalorder %s33, 1
      %p177 = por %p175, %p176
      %p178 = scmp.ne.s32.totalorder %s169, %s170
      %p179 = scmp.eq.s32.totalorder %s33, 0
      %p180 = por %p178, %p179
      %p181 = scmp.ne.s32.totalorder %s169, %s170
      %p182 = scmp.eq.s32.totalorder %s34, 1
      %p183 = por %p181, %p182
      %p185 = scmp.ne.s32.totalorder %s170, %s184
      %p186 = scmp.eq.s32.totalorder %s34, 0
      %p187 = por %p185, %p186
      %s189 = sadd.s32 %s188, 1
      %p192 = scmp.eq.s32.totalorder %s28, 1
      %p193 = scmp.ne.s32.totalorder %s188, %s190
      %p194 = scmp.eq.s32.totalorder %s28, 0
      %p195 = por %p193, %p194
      %p196 = scmp.ne.s32.totalorder %s188, %s190
      %p197 = scmp.eq.s32.totalorder %s33, 1
      %p198 = por %p196, %p197
      %p199 = scmp.ne.s32.totalorder %s190, %s191
      %p200 = scmp.eq.s32.totalorder %s33, 0
      %p201 = por %p199, %p200
      %p202 = scmp.ne.s32.totalorder %s190, %s191
      %p203 = scmp.eq.s32.totalorder %s34, 1
      %p204 = por %p202, %p203
      %p206 = scmp.ne.s32.totalorder %s191, %s205
      %p207 = scmp.eq.s32.totalorder %s34, 0
      %p208 = por %p206, %p207
      %s209 = ssub.s32 %s35, %s47
      %p210 = scmp.eq.s32.totalorder %s209, 0
      %s212 = sadd.s32 %s211, 1
      %s213 = scalar_select %p210, %s211, %s212
      %p216 = pneg %p210
      %p217 = scmp.eq.s32.totalorder %s28, 1
      %p218 = por %p216, %p217
      %p219 = scmp.ne.s32.totalorder %s211, %s214
      %p220 = scmp.eq.s32.totalorder %s28, 0
      %p221 = por %p219, %p220
      %p222 = scmp.ne.s32.totalorder %s211, %s214
      %p223 = scmp.eq.s32.totalorder %s33, 1
      %p224 = por %p222, %p223
      %p225 = scmp.ne.s32.totalorder %s214, %s215
      %p226 = scmp.eq.s32.totalorder %s33, 0
      %p227 = por %p225, %p226
      %p228 = scmp.ne.s32.totalorder %s214, %s215
      %p229 = scmp.eq.s32.totalorder %s34, 1
      %p230 = por %p228, %p229
      %p232 = scmp.ne.s32.totalorder %s215, %s231
      %p233 = scmp.eq.s32.totalorder %s34, 0
      %p234 = por %p232, %p233
      %s235 = ssub.s32 %s35, %s47
      %p236 = scmp.eq.s32.totalorder %s235, 0
      %s238 = sadd.s32 %s237, 1
      %s239 = scalar_select %p236, %s237, %s238
      %p242 = pneg %p236
      %p243 = scmp.eq.s32.totalorder %s28, 1
      %p244 = por %p242, %p243
      %p245 = scmp.ne.s32.totalorder %s237, %s240
      %p246 = scmp.eq.s32.totalorder %s28, 0
      %p247 = por %p245, %p246
      %p248 = scmp.ne.s32.totalorder %s237, %s240
      %p249 = scmp.eq.s32.totalorder %s33, 1
      %p250 = por %p248, %p249
      %p251 = scmp.ne.s32.totalorder %s240, %s241
      %p252 = scmp.eq.s32.totalorder %s33, 0
      %p253 = por %p251, %p252
      %p254 = scmp.ne.s32.totalorder %s240, %s241
      %p255 = scmp.eq.s32.totalorder %s34, 1
      %p256 = por %p254, %p255
      %p258 = scmp.ne.s32.totalorder %s241, %s257
      %p259 = scmp.eq.s32.totalorder %s34, 0
      %p260 = por %p258, %p259
      %p261 = scmp.le.s32.totalorder 1, %s28
      %p262 = scmp.lt.s32.totalorder %s28, 3
      %p263 = pnand %p261, %p262
      %p264 = pneg %p263
      // Predicated region
      $region9: #{tpu_custom_call.1} parent=5 // pred_check
        _
      $region10: #{tpu_custom_call.1} parent=5 // pred_check_branch
        %266 = sbr.rel (%p263) target = $region12
      $region11: #{tpu_custom_call.1} parent=5 // pred_region
        %s267 = ssub.s32 %s28, 1
        // Predicated region
        $region13: #{tpu_custom_call.1} parent=11 // pred_check
          %p268 = pneg %p117
        $region14: #{tpu_custom_call.1} parent=11 // pred_check_branch
          %270 = sbr.rel (%p268) target = $region16
        $region15: #{tpu_custom_call.1} parent=11 // pred_region
          %s272 = ssub.s32 512, 512
          %273 = vsyncadd [#allocation7], %s272
          %s274 = sshll.u32 [#allocation8], 4
          %s275 = int_to_ptr.vmem [resolvable:$true] %s274
          %280 = dma.hbm_to_vmem [thread:$0]  %s2, 512, %s275, [#allocation7], 128, 128, 8
        $region16: #{tpu_custom_call.1} parent=11 // pred_fallthru
          _
        // Predicated region
        $region17: #{tpu_custom_call.1} parent=11 // pred_check
          %p281 = pneg %p138
        $region18: #{tpu_custom_call.1} parent=11 // pred_check_branch
          %283 = sbr.rel (%p281) target = $region20
        $region19: #{tpu_custom_call.1} parent=11 // pred_region
          _
        $region20: #{tpu_custom_call.1} parent=11 // pred_fallthru
          _
        // Predicated region
        $region21: #{tpu_custom_call.1} parent=11 // pred_check
          %p284 = pneg %p159
        $region22: #{tpu_custom_call.1} parent=11 // pred_check_branch
          %286 = sbr.rel (%p284) target = $region24
        $region23: #{tpu_custom_call.1} parent=11 // pred_region
          %s288 = ssub.s32 512, 512
          %289 = vsyncadd [#allocation10], %s288
          %s290 = sshll.u32 [#allocation9], 4
          %s291 = int_to_ptr.vmem [resolvable:$true] %s290
          %296 = dma.hbm_to_vmem [thread:$0]  %s4, 512, %s291, [#allocation10], 128, 128, 8
        $region24: #{tpu_custom_call.1} parent=11 // pred_fallthru
          _
        // Predicated region
        $region25: #{tpu_custom_call.1} parent=11 // pred_check
          %p297 = pneg %p180
        $region26: #{tpu_custom_call.1} parent=11 // pred_check_branch
          %299 = sbr.rel (%p297) target = $region28
        $region27: #{tpu_custom_call.1} parent=11 // pred_region
          _
        $region28: #{tpu_custom_call.1} parent=11 // pred_fallthru
          _
        // Predicated region
        $region29: #{tpu_custom_call.1} parent=11 // pred_check
          %p300 = pneg %p201
        $region30: #{tpu_custom_call.1} parent=11 // pred_check_branch
          %302 = sbr.rel (%p300) target = $region32
        $region31: #{tpu_custom_call.1} parent=11 // pred_region
          %s304 = ssub.s32 512, 512
          %305 = vsyncadd [#allocation10], %s304
          %s306 = sshll.u32 [#allocation11], 4
          %s307 = int_to_ptr.vmem [resolvable:$true] %s306
          %312 = dma.hbm_to_vmem [thread:$0]  %s6, 512, %s307, [#allocation10], 128, 128, 8
        $region32: #{tpu_custom_call.1} parent=11 // pred_fallthru
          _
      $region12: #{tpu_custom_call.1} parent=5 // pred_fallthru
        _
      %p313 = scmp.lt.s32.totalorder %s28, 2
      // Predicated region
      $region33: #{tpu_custom_call.1} parent=5 // pred_check
        %p314 = pneg %p313
      $region34: #{tpu_custom_call.1} parent=5 // pred_check_branch
        %316 = sbr.rel (%p314) target = $region36
      $region35: #{tpu_custom_call.1} parent=5 // pred_region
        // Predicated region
        $region37: #{tpu_custom_call.1} parent=35 // pred_check
          %p317 = pneg %p62
        $region38: #{tpu_custom_call.1} parent=35 // pred_check_branch
          %319 = sbr.rel (%p317) target = $region40
        $region39: #{tpu_custom_call.1} parent=35 // pred_region
          %s320 = sand.u32 %s52, 1
          %s321 = scalar_lea.sflag [#allocation4], %s320
          %s322 = sand.u32 %s52, 1
          %s323 = smul.addr %s322, 8
          %s324 = scalar_lea.vmem [#allocation3], %s323
          %s326 = ssub.s32 128, 128
          %327 = vsyncadd %s321, %s326
          %s328 = sadd.s32 %s36, %s35
          %s329 = smul.addr %s328, 128
          %s330 = scalar_lea.hbm %s0, %s329
          %s332 = sshll.u32 %s324, 4
          %s333 = int_to_ptr.vmem [resolvable:$true] %s332
          %335 = dma.hbm_to_vmem [thread:$0]  %s330, 128, %s333, %s321
        $region40: #{tpu_custom_call.1} parent=35 // pred_fallthru
          _
        // Predicated region
        $region41: #{tpu_custom_call.1} parent=35 // pred_check
          %p336 = pneg %p90
        $region42: #{tpu_custom_call.1} parent=35 // pred_check_branch
          %338 = sbr.rel (%p336) target = $region44
        $region43: #{tpu_custom_call.1} parent=35 // pred_region
          %s339 = sand.u32 %s28, 1
          %s340 = scalar_lea.sflag [#allocation7], %s339
          %s341 = sand.u32 %s80, 1
          %s342 = smul.addr %s341, 8
          %s343 = scalar_lea.vmem [#allocation6], %s342
          %s345 = ssub.s32 128, 128
          %346 = vsyncadd %s340, %s345
          %s347 = sadd.s32 %s36, %s35
          %s348 = smul.addr %s347, 128
          %s349 = scalar_lea.hbm %s1, %s348
          %s351 = sshll.u32 %s343, 4
          %s352 = int_to_ptr.vmem [resolvable:$true] %s351
          %354 = dma.hbm_to_vmem [thread:$0]  %s349, 128, %s352, %s340
        $region44: #{tpu_custom_call.1} parent=35 // pred_fallthru
          _
      $region36: #{tpu_custom_call.1} parent=5 // pred_fallthru
        _
      %p355 = scmp.le.s32.totalorder 1, %s28
      %p356 = scmp.lt.s32.totalorder %s28, 3
      %p357 = pnand %p355, %p356
      %p358 = pneg %p357
      // Predicated region
      $region45: #{tpu_custom_call.1} parent=5 // pred_check
        _
      $region46: #{tpu_custom_call.1} parent=5 // pred_check_branch
        %360 = sbr.rel (%p357) target = $region48
      $region47: #{tpu_custom_call.1} parent=5 // pred_region
        %s361 = ssub.s32 %s28, 1
        %s362 = sand.u32 %s55, 1
        %s363 = scalar_lea.sflag [#allocation4], %s362
        %s364 = sand.u32 %s55, 1
        %s365 = smul.addr %s364, 8
        %s366 = scalar_lea.vmem [#allocation3], %s365
        // Predicated region
        $region49: #{tpu_custom_call.1} parent=47 // pred_check
          %p367 = pneg %p68
        $region50: #{tpu_custom_call.1} parent=47 // pred_check_branch
          %369 = sbr.rel (%p367) target = $region52
        $region51: #{tpu_custom_call.1} parent=47 // pred_region
          %370 = dma.done %s363, 128
        $region52: #{tpu_custom_call.1} parent=47 // pred_fallthru
          _
        %s371 = sand.u32 %s33, 1
        %s372 = scalar_lea.sflag [#allocation7], %s371
        %s373 = sand.u32 %s83, 1
        %s374 = smul.addr %s373, 8
        %s375 = scalar_lea.vmem [#allocation6], %s374
        // Predicated region
        $region53: #{tpu_custom_call.1} parent=47 // pred_check
          %p376 = pneg %p96
        $region54: #{tpu_custom_call.1} parent=47 // pred_check_branch
          %378 = sbr.rel (%p376) target = $region56
        $region55: #{tpu_custom_call.1} parent=47 // pred_region
          %379 = dma.done %s372, 128
        $region56: #{tpu_custom_call.1} parent=47 // pred_fallthru
          _
        // Predicated region
        $region57: #{tpu_custom_call.1} parent=47 // pred_check
          %p380 = pneg %p117
        $region58: #{tpu_custom_call.1} parent=47 // pred_check_branch
          %382 = sbr.rel (%p380) target = $region60
        $region59: #{tpu_custom_call.1} parent=47 // pred_region
          %383 = dma.done [#allocation7], 512
        $region60: #{tpu_custom_call.1} parent=47 // pred_fallthru
          _
        // Predicated region
        $region61: #{tpu_custom_call.1} parent=47 // pred_check
          %p384 = pneg %p159
        $region62: #{tpu_custom_call.1} parent=47 // pred_check_branch
          %386 = sbr.rel (%p384) target = $region64
        $region63: #{tpu_custom_call.1} parent=47 // pred_region
          %387 = dma.done [#allocation10], 512
        $region64: #{tpu_custom_call.1} parent=47 // pred_fallthru
          _
        // Predicated region
        $region65: #{tpu_custom_call.1} parent=47 // pred_check
          %p388 = pneg %p201
        $region66: #{tpu_custom_call.1} parent=47 // pred_check_branch
          %390 = sbr.rel (%p388) target = $region68
        $region67: #{tpu_custom_call.1} parent=47 // pred_region
          %391 = dma.done [#allocation10], 512
        $region68: #{tpu_custom_call.1} parent=47 // pred_fallthru
          _
        %s392 = sand.u32 %s55, 1
        %s393 = scalar_lea.sflag [#allocation4], %s392
        %s394 = sand.u32 %s55, 1
        %s395 = smul.addr %s394, 8
        %s396 = scalar_lea.vmem [#allocation3], %s395
        %p397 = pneg %p68
        %p398 = pneg %p65
        %s399 = sand.u32 %s33, 1
        %s400 = scalar_lea.sflag [#allocation7], %s399
        %s401 = sand.u32 %s83, 1
        %s402 = smul.addr %s401, 8
        %s403 = scalar_lea.vmem [#allocation6], %s402
        %p404 = pneg %p96
        %p405 = pneg %p93
        %p406 = pneg %p117
        %p407 = pneg %p114
        %p408 = pneg %p138
        %p409 = pneg %p135
        %p410 = pneg %p159
        %p411 = pneg %p156
        %p412 = pneg %p180
        %p413 = pneg %p177
        %p414 = pneg %p201
        %p415 = pneg %p198
        %p416 = pneg %p227
        %p417 = pneg %p224
        %s418 = sand.u32 %s214, 1
        %s419 = scalar_lea.sflag [#allocation5], %s418
        %s420 = sand.u32 %s214, 1
        %s421 = smul.addr %s420, 32
        %s422 = scalar_lea.vmem [#allocation12], %s421
        %p423 = pneg %p253
        %p424 = pneg %p250
        %s425 = sand.u32 %s240, 1
        %s426 = scalar_lea.sflag [#allocation14], %s425
        %s427 = sand.u32 %s240, 1
        %s428 = scalar_lea.vmem [#allocation13], %s427
        %p429 = scmp.eq.s32.totalorder %s38, 0
        // Predicated region
        $region69: #{tpu_custom_call.1} parent=47 // pred_check
          %p430 = pneg %p429
        $region70: #{tpu_custom_call.1} parent=47 // pred_check_branch
          %432 = sbr.rel (%p430) target = $region72
        $region71: #{tpu_custom_call.1} parent=47 // pred_region
          %vm433 = vcmask 261120
          %434 = vst.msk [vmem:[#allocation2] sm:$0xff] %vm433, 0.0
          %435 = vst.msk [vmem:[#allocation2 + $0x8] sm:$0xff] %vm433, 0.0
          %436 = vst.msk [vmem:[#allocation2 + $0x10] sm:$0xff] %vm433, 0.0
          %437 = vst.msk [vmem:[#allocation2 + $0x18] sm:$0xff] %vm433, 0.0
          %vm438 = vcmask 253952
          %439 = vst.msk [vmem:[%s428] sm:$0x1] %vm438, 0.0
        $region72: #{tpu_custom_call.1} parent=47 // pred_fallthru
          _
        %v440 = vld [vmem:[%s366] sm:$0xff]
        %v441 = vld [vmem:[#allocation8] sm:$0xff]
        %v442 = vld [vmem:[#allocation8 + $0x8] sm:$0xff]
        %v443 = vld [vmem:[#allocation8 + $0x10] sm:$0xff]
        %v444 = vld [vmem:[#allocation8 + $0x18] sm:$0xff]
        %v445 = vld [vmem:[%s3] sm:$0x1]
        %v447 = vlaneseq
        %v448 = vshrl.u32 %v447, 7
        %v449 = vsub.s32 0, %v448
        %v450 = vrot.slane %v445, %v449
        %vm452 = vcmask 261120
        %v454 = vsel %vm452, %v440, 0
        %456 = vmatprep.subr.mxu0 0.0
        %457 = vmatpush1.msra.mxu0 0.0
        %458 = vmatprep.subr.mxu0 0.0
        %459 = vmatpush1.msra.mxu0 0.0
        %460 = vmatprep.subr.mxu0 0.0
        %461 = vmatpush1.msra.mxu0 0.0
        %462 = vmatprep.subr.mxu0 0.0
        %463 = vmatpush1.msra.mxu0 0.0
        %464 = vmatprep.subr.mxu0 0.0
        %465 = vmatpush1.msra.mxu0 0.0
        %466 = vmatprep.subr.mxu0 0.0
        %467 = vmatpush1.msra.mxu0 0.0
        %468 = vmatprep.subr.mxu0 0.0
        %469 = vmatpush1.msra.mxu0 0.0
        %470 = vmatprep.subr.mxu0 0.0
        %471 = vmatpush1.msra.mxu0 0.0
        %472 = vmatprep.subr.mxu0 0.0
        %473 = vmatpush1.msra.mxu0 0.0
        %474 = vmatprep.subr.mxu0 0.0
        %475 = vmatpush1.msra.mxu0 0.0
        %476 = vmatprep.subr.mxu0 0.0
        %477 = vmatpush1.msra.mxu0 0.0
        %478 = vmatprep.subr.mxu0 0.0
        %479 = vmatpush1.msra.mxu0 0.0
        %480 = vmatprep.subr.mxu0 0.0
        %481 = vmatpush1.msra.mxu0 %v444
        %482 = vmatprep.subr.mxu0 0.0
        %483 = vmatpush1.msra.mxu0 %v443
        %484 = vmatprep.subr.mxu0 0.0
        %485 = vmatpush1.msra.mxu0 %v442
        %486 = vmatprep.subr.mxu0 0.0
        %487 = vmatpush1.msra.mxu0 %v441
        %488 = vmatprep.subr.mxu0 0.0
        %489 = vmatpush2.msra.mxu0 0.0
        %490 = vmatprep.subr.mxu0 0.0
        %491 = vmatpush2.msra.mxu0 0.0
        %492 = vmatprep.subr.mxu0 0.0
        %493 = vmatpush2.msra.mxu0 0.0
        %494 = vmatprep.subr.mxu0 0.0
        %495 = vmatpush2.msra.mxu0 0.0
        %496 = vmatprep.subr.mxu0 0.0
        %497 = vmatpush2.msra.mxu0 0.0
        %498 = vmatprep.subr.mxu0 0.0
        %499 = vmatpush2.msra.mxu0 0.0
        %500 = vmatprep.subr.mxu0 0.0
        %501 = vmatpush2.msra.mxu0 0.0
        %502 = vmatprep.subr.mxu0 0.0
        %503 = vmatpush2.msra.mxu0 0.0
        %504 = vmatprep.subr.mxu0 0.0
        %505 = vmatpush2.msra.mxu0 0.0
        %506 = vmatprep.subr.mxu0 0.0
        %507 = vmatpush2.msra.mxu0 0.0
        %508 = vmatprep.subr.mxu0 0.0
        %509 = vmatpush2.msra.mxu0 0.0
        %510 = vmatprep.subr.mxu0 0.0
        %511 = vmatpush2.msra.mxu0 0.0
        %512 = vmatprep.subr.mxu0 0.0
        %513 = vmatpush2.msra.mxu0 0.0
        %514 = vmatprep.subr.mxu0 0.0
        %515 = vmatpush2.msra.mxu0 0.0
        %516 = vmatprep.subr.mxu0 0.0
        %517 = vmatpush2.msra.mxu0 0.0
        %518 = vmatprep.subr.mxu0 0.0
        %519 = vmatpush2.msra.mxu0 0.0
        %520 = vmatprep.mubr.f32.mxu0 0.0
        %521 = vmatmul.mubr.f32.gmra.mxu0 %v454
        %v522 = vpop.f32.mrf.mxu0
        %v523 = vadd.f32 %v450, %v522
        %v524 = vpop.f32.mrf.mxu0
        %525 = vdwg.mxu0
        %vm526 = vcmp.gt.f32.partialorder %v523, 0.0
        %v527 = vadd.f32 %v523, 1.0
        %v528 = vmul.f32 %v523, 1.442695
        %v529 = vpow.pop %v528
        %v530 = vsel %vm526, %v527, %v529
        %v531 = vld [vmem:[%s375] sm:$0xff]
        %v532 = vld [vmem:[#allocation9] sm:$0xff]
        %v533 = vld [vmem:[#allocation9 + $0x8] sm:$0xff]
        %v534 = vld [vmem:[#allocation9 + $0x10] sm:$0xff]
        %v535 = vld [vmem:[#allocation9 + $0x18] sm:$0xff]
        %v536 = vld [vmem:[%s5] sm:$0x1]
        %v538 = vlaneseq
        %v539 = vshrl.u32 %v538, 7
        %v540 = vsub.s32 0, %v539
        %v541 = vrot.slane %v536, %v540
        %v544 = vsel %vm452, %v531, 0
        %546 = vmatprep.subr.mxu0 0.0
        %547 = vmatpush1.msra.mxu0 0.0
        %548 = vmatprep.subr.mxu0 0.0
        %549 = vmatpush1.msra.mxu0 0.0
        %550 = vmatprep.subr.mxu0 0.0
        %551 = vmatpush1.msra.mxu0 0.0
        %552 = vmatprep.subr.mxu0 0.0
        %553 = vmatpush1.msra.mxu0 0.0
        %554 = vmatprep.subr.mxu0 0.0
        %555 = vmatpush1.msra.mxu0 0.0
        %556 = vmatprep.subr.mxu0 0.0
        %557 = vmatpush1.msra.mxu0 0.0
        %558 = vmatprep.subr.mxu0 0.0
        %559 = vmatpush1.msra.mxu0 0.0
        %560 = vmatprep.subr.mxu0 0.0
        %561 = vmatpush1.msra.mxu0 0.0
        %562 = vmatprep.subr.mxu0 0.0
        %563 = vmatpush1.msra.mxu0 0.0
        %564 = vmatprep.subr.mxu0 0.0
        %565 = vmatpush1.msra.mxu0 0.0
        %566 = vmatprep.subr.mxu0 0.0
        %567 = vmatpush1.msra.mxu0 0.0
        %568 = vmatprep.subr.mxu0 0.0
        %569 = vmatpush1.msra.mxu0 0.0
        %570 = vmatprep.subr.mxu0 0.0
        %571 = vmatpush1.msra.mxu0 %v535
        %572 = vmatprep.subr.mxu0 0.0
        %573 = vmatpush1.msra.mxu0 %v534
        %574 = vmatprep.subr.mxu0 0.0
        %575 = vmatpush1.msra.mxu0 %v533
        %576 = vmatprep.subr.mxu0 0.0
        %577 = vmatpush1.msra.mxu0 %v532
        %578 = vmatprep.subr.mxu0 0.0
        %579 = vmatpush2.msra.mxu0 0.0
        %580 = vmatprep.subr.mxu0 0.0
        %581 = vmatpush2.msra.mxu0 0.0
        %582 = vmatprep.subr.mxu0 0.0
        %583 = vmatpush2.msra.mxu0 0.0
        %584 = vmatprep.subr.mxu0 0.0
        %585 = vmatpush2.msra.mxu0 0.0
        %586 = vmatprep.subr.mxu0 0.0
        %587 = vmatpush2.msra.mxu0 0.0
        %588 = vmatprep.subr.mxu0 0.0
        %589 = vmatpush2.msra.mxu0 0.0
        %590 = vmatprep.subr.mxu0 0.0
        %591 = vmatpush2.msra.mxu0 0.0
        %592 = vmatprep.subr.mxu0 0.0
        %593 = vmatpush2.msra.mxu0 0.0
        %594 = vmatprep.subr.mxu0 0.0
        %595 = vmatpush2.msra.mxu0 0.0
        %596 = vmatprep.subr.mxu0 0.0
        %597 = vmatpush2.msra.mxu0 0.0
        %598 = vmatprep.subr.mxu0 0.0
        %599 = vmatpush2.msra.mxu0 0.0
        %600 = vmatprep.subr.mxu0 0.0
        %601 = vmatpush2.msra.mxu0 0.0
        %602 = vmatprep.subr.mxu0 0.0
        %603 = vmatpush2.msra.mxu0 0.0
        %604 = vmatprep.subr.mxu0 0.0
        %605 = vmatpush2.msra.mxu0 0.0
        %606 = vmatprep.subr.mxu0 0.0
        %607 = vmatpush2.msra.mxu0 0.0
        %608 = vmatprep.subr.mxu0 0.0
        %609 = vmatpush2.msra.mxu0 0.0
        %610 = vmatprep.mubr.f32.mxu0 0.0
        %611 = vmatmul.mubr.f32.gmra.mxu0 %v544
        %v612 = vpop.f32.mrf.mxu0
        %v613 = vadd.f32 %v541, %v612
        %v614 = vpop.f32.mrf.mxu0
        %615 = vdwg.mxu0
        %v616 = vld [vmem:[#allocation2] sm:$0xff]
        %v617 = vld [vmem:[#allocation2 + $0x8] sm:$0xff]
        %v618 = vld [vmem:[#allocation2 + $0x10] sm:$0xff]
        %v619 = vld [vmem:[#allocation2 + $0x18] sm:$0xff]
        %620 = vxpose.xlu0.b32.start [1/16] %v530, 128
        %621 = vxpose.xlu0.b32.cont [2/16] 0.0, 128
        %622 = vxpose.xlu0.b32.cont [3/16] 0.0, 128
        %623 = vxpose.xlu0.b32.cont [4/16] 0.0, 128
        %624 = vxpose.xlu0.b32.cont [5/16] 0.0, 128
        %625 = vxpose.xlu0.b32.cont [6/16] 0.0, 128
        %626 = vxpose.xlu0.b32.cont [7/16] 0.0, 128
        %627 = vxpose.xlu0.b32.cont [8/16] 0.0, 128
        %628 = vxpose.xlu0.b32.cont [9/16] 0.0, 128
        %629 = vxpose.xlu0.b32.cont [10/16] 0.0, 128
        %630 = vxpose.xlu0.b32.cont [11/16] 0.0, 128
        %631 = vxpose.xlu0.b32.cont [12/16] 0.0, 128
        %632 = vxpose.xlu0.b32.cont [13/16] 0.0, 128
        %633 = vxpose.xlu0.b32.cont [14/16] 0.0, 128
        %634 = vxpose.xlu0.b32.cont [15/16] 0.0, 128
        %635 = vxpose.xlu0.b32.end [16/16] 0.0, 128
        %v636 = vpop.trf.xlu0
        %v637 = vpop.trf.xlu0
        %v638 = vpop.trf.xlu0
        %v639 = vpop.trf.xlu0
        %v640 = vpop.trf.xlu0
        %v641 = vpop.trf.xlu0
        %v642 = vpop.trf.xlu0
        %v643 = vpop.trf.xlu0
        %v644 = vpop.trf.xlu0
        %v645 = vpop.trf.xlu0
        %v646 = vpop.trf.xlu0
        %v647 = vpop.trf.xlu0
        %v648 = vpop.trf.xlu0
        %v649 = vpop.trf.xlu0
        %v650 = vpop.trf.xlu0
        %v651 = vpop.trf.xlu0
        %vm652 = vcmask 64512
        %v654 = vsel %vm652, %v636, 0
        %v657 = vsel %vm652, %v637, 0
        %v660 = vsel %vm652, %v638, 0
        %v663 = vsel %vm652, %v639, 0
        %665 = vmatprep.subr.mxu0 0.0
        %666 = vmatpush1.msra.mxu0 0.0
        %667 = vmatprep.subr.mxu0 0.0
        %668 = vmatpush1.msra.mxu0 0.0
        %669 = vmatprep.subr.mxu0 0.0
        %670 = vmatpush1.msra.mxu0 0.0
        %671 = vmatprep.subr.mxu0 0.0
        %672 = vmatpush1.msra.mxu0 0.0
        %673 = vmatprep.subr.mxu0 0.0
        %674 = vmatpush1.msra.mxu0 0.0
        %675 = vmatprep.subr.mxu0 0.0
        %676 = vmatpush1.msra.mxu0 0.0
        %677 = vmatprep.subr.mxu0 0.0
        %678 = vmatpush1.msra.mxu0 0.0
        %679 = vmatprep.subr.mxu0 0.0
        %680 = vmatpush1.msra.mxu0 0.0
        %681 = vmatprep.subr.mxu0 0.0
        %682 = vmatpush1.msra.mxu0 0.0
        %683 = vmatprep.subr.mxu0 0.0
        %684 = vmatpush1.msra.mxu0 0.0
        %685 = vmatprep.subr.mxu0 0.0
        %686 = vmatpush1.msra.mxu0 0.0
        %687 = vmatprep.subr.mxu0 0.0
        %688 = vmatpush1.msra.mxu0 0.0
        %689 = vmatprep.subr.mxu0 0.0
        %690 = vmatpush1.msra.mxu0 0.0
        %691 = vmatprep.subr.mxu0 0.0
        %692 = vmatpush1.msra.mxu0 0.0
        %693 = vmatprep.subr.mxu0 0.0
        %694 = vmatpush1.msra.mxu0 0.0
        %695 = vmatprep.subr.mxu0 0.0
        %696 = vmatpush1.msra.mxu0 %v613
        %697 = vmatprep.subr.mxu0 0.0
        %698 = vmatpush2.msra.mxu0 0.0
        %699 = vmatprep.subr.mxu0 0.0
        %700 = vmatpush2.msra.mxu0 0.0
        %701 = vmatprep.subr.mxu0 0.0
        %702 = vmatpush2.msra.mxu0 0.0
        %703 = vmatprep.subr.mxu0 0.0
        %704 = vmatpush2.msra.mxu0 0.0
        %705 = vmatprep.subr.mxu0 0.0
        %706 = vmatpush2.msra.mxu0 0.0
        %707 = vmatprep.subr.mxu0 0.0
        %708 = vmatpush2.msra.mxu0 0.0
        %709 = vmatprep.subr.mxu0 0.0
        %710 = vmatpush2.msra.mxu0 0.0
        %711 = vmatprep.subr.mxu0 0.0
        %712 = vmatpush2.msra.mxu0 0.0
        %713 = vmatprep.subr.mxu0 0.0
        %714 = vmatpush2.msra.mxu0 0.0
        %715 = vmatprep.subr.mxu0 0.0
        %716 = vmatpush2.msra.mxu0 0.0
        %717 = vmatprep.subr.mxu0 0.0
        %718 = vmatpush2.msra.mxu0 0.0
        %719 = vmatprep.subr.mxu0 0.0
        %720 = vmatpush2.msra.mxu0 0.0
        %721 = vmatprep.subr.mxu0 0.0
        %722 = vmatpush2.msra.mxu0 0.0
        %723 = vmatprep.subr.mxu0 0.0
        %724 = vmatpush2.msra.mxu0 0.0
        %725 = vmatprep.subr.mxu0 0.0
        %726 = vmatpush2.msra.mxu0 0.0
        %727 = vmatprep.subr.mxu0 0.0
        %728 = vmatpush2.msra.mxu0 0.0
        %729 = vmatprep.mubr.f32.mxu0 0.0
        %730 = vmatmul.mubr.f32.gmra.mxu0 %v654
        %v731 = vpop.f32.mrf.mxu0
        %v732 = vadd.f32 0.0, %v731
        %v733 = vpop.f32.mrf.mxu0
        %734 = vmatprep.mubr.f32.mxu0 0.0
        %735 = vmatmul.mubr.f32.gmra.mxu0 %v657
        %v736 = vpop.f32.mrf.mxu0
        %v737 = vadd.f32 0.0, %v736
        %v738 = vpop.f32.mrf.mxu0
        %739 = vmatprep.mubr.f32.mxu0 0.0
        %740 = vmatmul.mubr.f32.gmra.mxu0 %v660
        %v741 = vpop.f32.mrf.mxu0
        %v742 = vadd.f32 0.0, %v741
        %v743 = vpop.f32.mrf.mxu0
        %744 = vmatprep.mubr.f32.mxu0 0.0
        %745 = vmatmul.mubr.f32.gmra.mxu0 %v663
        %v746 = vpop.f32.mrf.mxu0
        %v747 = vadd.f32 0.0, %v746
        %v748 = vpop.f32.mrf.mxu0
        %749 = vdwg.mxu0
        %v750 = vadd.f32 %v616, %v732
        %v751 = vadd.f32 %v617, %v737
        %v752 = vadd.f32 %v618, %v742
        %v753 = vadd.f32 %v619, %v747
        %754 = vst.msk [vmem:[#allocation2] sm:$0xff] %vm452, %v750
        %755 = vst.msk [vmem:[#allocation2 + $0x8] sm:$0xff] %vm452, %v751
        %756 = vst.msk [vmem:[#allocation2 + $0x10] sm:$0xff] %vm452, %v752
        %757 = vst.msk [vmem:[#allocation2 + $0x18] sm:$0xff] %vm452, %v753
        %v758 = vld [vmem:[%s428] sm:$0x1]
        %v759 = vsel %vm452, %v530, 0.0
        %v760 = vrot.slane %v759, 4
        %v761 = vadd.f32 %v759, %v760
        %v762 = vrot.slane %v761, 2
        %v763 = vadd.f32 %v761, %v762
        %v764 = vrot.slane %v763, 1
        %v765 = vadd.f32 %v763, %v764
        %v766 = vadd.f32 %v758, %v765
        %vm767 = vcmask 253952
        %768 = vst.msk [vmem:[%s428] sm:$0x1] %vm767, %v766
        // Predicated region
        $region73: #{tpu_custom_call.1} parent=47 // pred_check
          %p769 = pneg %p429
        $region74: #{tpu_custom_call.1} parent=47 // pred_check_branch
          %771 = sbr.rel (%p769) target = $region76
        $region75: #{tpu_custom_call.1} parent=47 // pred_region
          %v772 = vld [vmem:[#allocation2] sm:$0xff]
          %v773 = vld [vmem:[#allocation2 + $0x8] sm:$0xff]
          %v774 = vld [vmem:[#allocation2 + $0x10] sm:$0xff]
          %v775 = vld [vmem:[#allocation2 + $0x18] sm:$0xff]
          %v776 = vld [vmem:[#allocation11] sm:$0xff]
          %v777 = vld [vmem:[#allocation11 + $0x8] sm:$0xff]
          %v778 = vld [vmem:[#allocation11 + $0x10] sm:$0xff]
          %v779 = vld [vmem:[#allocation11 + $0x18] sm:$0xff]
          %v780 = vmul.f32 %v772, %v776
          %v781 = vmul.f32 %v773, %v777
          %v782 = vmul.f32 %v774, %v778
          %v783 = vmul.f32 %v775, %v779
          %784 = vst.msk [vmem:[%s422] sm:$0xff] %vm452, %v780
          %785 = vst.msk [vmem:[%s422 + $0x8] sm:$0xff] %vm452, %v781
          %786 = vst.msk [vmem:[%s422 + $0x10] sm:$0xff] %vm452, %v782
          %787 = vst.msk [vmem:[%s422 + $0x18] sm:$0xff] %vm452, %v783
        $region76: #{tpu_custom_call.1} parent=47 // pred_fallthru
          _
        %s788 = sand.u32 %s214, 1
        %s789 = scalar_lea.sflag [#allocation5], %s788
        %s790 = sand.u32 %s214, 1
        %s791 = smul.addr %s790, 32
        %s792 = scalar_lea.vmem [#allocation12], %s791
        %s793 = sand.u32 %s240, 1
        %s794 = scalar_lea.sflag [#allocation14], %s793
        %s795 = sand.u32 %s240, 1
        %s796 = scalar_lea.vmem [#allocation13], %s795
        // Predicated region
        $region77: #{tpu_custom_call.1} parent=47 // pred_check
          %p797 = pneg %p224
        $region78: #{tpu_custom_call.1} parent=47 // pred_check_branch
          %799 = sbr.rel (%p797) target = $region80
        $region79: #{tpu_custom_call.1} parent=47 // pred_region
          %s801 = ssub.s32 512, 512
          %802 = vsyncadd %s789, %s801
          %s803 = smul.addr %s37, 4
          %s804 = smul.addr %s803, 128
          %s805 = scalar_lea.hbm %s7, %s804
          %s806 = sshll.u32 %s792, 4
          %s807 = int_to_ptr.vmem [resolvable:$true] %s806
          %812 = dma.vmem_to_hbm [thread:$0]  %s807, 512, %s805, %s789, 128, 128, 8
        $region80: #{tpu_custom_call.1} parent=47 // pred_fallthru
          _
        // Predicated region
        $region81: #{tpu_custom_call.1} parent=47 // pred_check
          %p813 = pneg %p250
        $region82: #{tpu_custom_call.1} parent=47 // pred_check_branch
          %815 = sbr.rel (%p813) target = $region84
        $region83: #{tpu_custom_call.1} parent=47 // pred_region
          %s817 = ssub.s32 16, 16
          %818 = vsyncadd %s794, %s817
          %s819 = smul.addr %s37, 16
          %s820 = scalar_lea.hbm %s8, %s819
          %s822 = sshll.u32 %s796, 4
          %s823 = int_to_ptr.vmem [resolvable:$true] %s822
          %825 = dma.vmem_to_hbm [thread:$0]  %s823, 16, %s820, %s794
        $region84: #{tpu_custom_call.1} parent=47 // pred_fallthru
          _
      $region48: #{tpu_custom_call.1} parent=5 // pred_fallthru
        _
      %p826 = scmp.le.s32.totalorder 2, %s28
      // Predicated region
      $region85: #{tpu_custom_call.1} parent=5 // pred_check
        %p827 = pneg %p826
      $region86: #{tpu_custom_call.1} parent=5 // pred_check_branch
        %829 = sbr.rel (%p827) target = $region88
      $region87: #{tpu_custom_call.1} parent=5 // pred_region
        %s830 = ssub.s32 %s28, 2
        // Predicated region
        $region89: #{tpu_custom_call.1} parent=87 // pred_check
          %p831 = pneg %p230
        $region90: #{tpu_custom_call.1} parent=87 // pred_check_branch
          %833 = sbr.rel (%p831) target = $region92
        $region91: #{tpu_custom_call.1} parent=87 // pred_region
          %s834 = sand.u32 %s215, 1
          %s835 = scalar_lea.sflag [#allocation5], %s834
          %s836 = sand.u32 %s215, 1
          %s837 = smul.addr %s836, 32
          %s838 = scalar_lea.vmem [#allocation12], %s837
          %839 = dma.done %s835, 512
        $region92: #{tpu_custom_call.1} parent=87 // pred_fallthru
          _
        // Predicated region
        $region93: #{tpu_custom_call.1} parent=87 // pred_check
          %p840 = pneg %p256
        $region94: #{tpu_custom_call.1} parent=87 // pred_check_branch
          %842 = sbr.rel (%p840) target = $region96
        $region95: #{tpu_custom_call.1} parent=87 // pred_region
          %s843 = sand.u32 %s241, 1
          %s844 = scalar_lea.sflag [#allocation14], %s843
          %s845 = sand.u32 %s241, 1
          %s846 = scalar_lea.vmem [#allocation13], %s845
          %847 = dma.done %s844, 16
        $region96: #{tpu_custom_call.1} parent=87 // pred_fallthru
          _
      $region88: #{tpu_custom_call.1} parent=5 // pred_fallthru
        _
    $region6: #{tpu_custom_call.1} parent=1 // loop_footer
      %s32 = sadd.s32 1, %s28
    $region7: #{tpu_custom_call.1} parent=1 // loop_footer_branch
      %27 = sbr.rel target = $region3
    $region8: #{tpu_custom_call.1} parent=1 // loop_exit
      _
    %848 = vsyncpa [#allocation4], 1
    %s849 = scalar_lea.sflag [#allocation4], 1
    %850 = vsyncpa %s849, 1
    %851 = vsyncpa [#allocation7], 1
    %s852 = scalar_lea.sflag [#allocation7], 1
    %853 = vsyncpa %s852, 1
    %854 = vsyncpa [#allocation10], 1
    %855 = vsyncpa [#allocation5], 1
    %s856 = scalar_lea.sflag [#allocation5], 1
    %857 = vsyncpa %s856, 1
    %858 = vsyncpa [#allocation14], 1
    %s859 = scalar_lea.sflag [#allocation14], 1
    %860 = vsyncpa %s859, 1

</llo_original>
